<compile_context>
chip_gen: v5e
topology: v5e:2x2
jax: 0.10.0
libtpu: 0.0.40
codegen_flags: <defaults>
</compile_context>

<pallas_src>
import functools

import jax
import jax.numpy as jnp
import numpy as np
from jax.experimental import pallas as pl
from jax.experimental.pallas import tpu as pltpu

BN_EPS = 1e-5


def _round_up(x, m):
    return (x + m - 1) // m * m


def _num_tensorcores_per_chip():
    """Best-effort generation detection: v7x has 2 TensorCores/chip, v5e/v6e have 1."""
    try:
        kind = getattr(jax.devices()[0], "device_kind", "").lower()
    except Exception:
        return 1
    return 2 if "v7" in kind else 1


# -----------------------------------------------------------------------------
# Kernel: fused 3-layer MLP (BN already folded into the weights), bf16 MXU path.
# -----------------------------------------------------------------------------
def kneenet_clinical_kernel(x_ref, w0_ref, w1_ref, wc_ref, bias_ref, out_ref):
    h1 = w0_ref.shape[1]
    h2 = w1_ref.shape[1]
    nout = wc_ref.shape[1]

    # tab.float() in the module; here the MXU consumes bf16 operands with f32
    # accumulation (preferred_element_type), which is the native TPU matmul path.
    x = x_ref[...].astype(jnp.bfloat16)

    # Packed biases: row 0 -> b0[:h1], row 1 -> b1[:h2], row 2 -> bc[:nout]
    # (lane-aligned static slices; f32).
    b0 = bias_ref[0:1, :h1]
    b1 = bias_ref[1:2, :h2]
    bc = bias_ref[2:3, :nout]

    # featurizer block 0: Linear(in, h1) + ReLU
    h = jnp.dot(x, w0_ref[...], preferred_element_type=jnp.float32) + b0
    h = jnp.maximum(h, 0.0).astype(jnp.bfloat16)

    # featurizer block 1: [BN1 folded] Linear(h1, h2) + ReLU
    h = jnp.dot(h, w1_ref[...], preferred_element_type=jnp.float32) + b1
    h = jnp.maximum(h, 0.0).astype(jnp.bfloat16)

    # classifier: [BN2 folded] Linear(h2, out); eval-mode dropouts are identity
    out = jnp.dot(h, wc_ref[...], preferred_element_type=jnp.float32) + bc
    out_ref[...] = out.astype(out_ref.dtype)


# -----------------------------------------------------------------------------
# Parameter construction (PyTorch-equivalent) and BN folding.
# -----------------------------------------------------------------------------
def _linear_init(key, n_in, n_out):
    """PyTorch nn.Linear default init: U(-1/sqrt(fan_in), 1/sqrt(fan_in))."""
    kw, kb = jax.random.split(key)
    bound = 1.0 / np.sqrt(n_in)
    # stored as (in_features, out_features) == torch_W.T  -> kernel does x @ W
    w = jax.random.uniform(kw, (n_in, n_out), jnp.float32, -bound, bound)
    b = jax.random.uniform(kb, (1, n_out), jnp.float32, -bound, bound)
    return w, b


def init_kneenet_clinical_params(key, tab_input_size, tab_layers, output_size):
    h1, h2 = tab_layers
    keys = jax.random.split(key, 11)
    w0, b0 = _linear_init(keys[0], tab_input_size, h1)
    w1, b1 = _linear_init(keys[1], h1, h2)
    wc, bc = _linear_init(keys[2], h2, output_size)
    # BatchNorm1d params / running stats (deterministic, non-trivial)
    g1 = jax.random.uniform(keys[3], (1, h1), jnp.float32, 0.5, 1.5)
    be1 = jax.random.uniform(keys[4], (1, h1), jnp.float32, -0.1, 0.1)
    rm1 = jax.random.uniform(keys[5], (1, h1), jnp.float32, -0.5, 0.5)
    rv1 = jax.random.uniform(keys[6], (1, h1), jnp.float32, 0.5, 1.5)
    g2 = jax.random.uniform(keys[7], (1, h2), jnp.float32, 0.5, 1.5)
    be2 = jax.random.uniform(keys[8], (1, h2), jnp.float32, -0.1, 0.1)
    rm2 = jax.random.uniform(keys[9], (1, h2), jnp.float32, -0.5, 0.5)
    rv2 = jax.random.uniform(keys[10], (1, h2), jnp.float32, 0.5, 1.5)
    return dict(w0=w0, b0=b0, g1=g1, be1=be1, rm1=rm1, rv1=rv1,
                w1=w1, b1=b1, g2=g2, be2=be2, rm2=rm2, rv2=rv2,
                wc=wc, bc=bc)


def fold_bn_params(p):
    """Fold eval-mode BatchNorm1d layers into the following Linear (exact, in f32),
    cast the folded weights to bf16 for the MXU, and pack the biases into one array."""
    # BN(h) = h * s + t  with  s = gamma * rsqrt(var + eps),  t = beta - mean * s
    s1 = p["g1"] * jax.lax.rsqrt(p["rv1"] + BN_EPS)            # (1, h1)
    t1 = p["be1"] - p["rm1"] * s1                              # (1, h1)
    w1 = p["w1"] * s1.T                                        # scale input rows
    b1 = p["b1"] + t1 @ p["w1"]

    s2 = p["g2"] * jax.lax.rsqrt(p["rv2"] + BN_EPS)            # (1, h2)
    t2 = p["be2"] - p["rm2"] * s2
    wc = p["wc"] * s2.T
    bc = p["bc"] + t2 @ p["wc"]

    h1 = p["w0"].shape[1]
    h2 = w1.shape[1]
    nout = wc.shape[1]
    maxd = max(h1, h2, nout)
    bias = jnp.zeros((3, maxd), jnp.float32)
    bias = bias.at[0, :h1].set(p["b0"][0])
    bias = bias.at[1, :h2].set(b1[0])
    bias = bias.at[2, :nout].set(bc[0])

    return dict(
        w0=p["w0"].astype(jnp.bfloat16),
        w1=w1.astype(jnp.bfloat16),
        wc=wc.astype(jnp.bfloat16),
        bias=bias,
    )


# -----------------------------------------------------------------------------
# Wrapper: tiling over the batch axis only (weights are tiny and stay resident).
# -----------------------------------------------------------------------------
@functools.partial(jax.jit, static_argnames=("batch_tile",))
def kneenet_clinical_forward(tab, fused, *, batch_tile=2048):
    B, F = tab.shape
    h1 = fused["w0"].shape[1]
    h2 = fused["w1"].shape[1]
    out_dim = fused["wc"].shape[1]
    bias_rows, bias_cols = fused["bias"].shape

    # Batch-tile selection (all static, trace-time Python):
    #  * single-TC parts (v5e/v6e): one step per call until B exceeds batch_tile —
    #    never split just to create extra (purely sequential) grid steps.
    #  * v7x (2 TCs): split the "parallel" batch axis into an even number of
    #    balanced steps so both TensorCores stay busy.
    num_tc = _num_tensorcores_per_chip()
    bt = max(8, min(batch_tile, _round_up(B, 8)))
    if num_tc > 1 and B > 8:
        steps = _round_up(max(num_tc, pl.cdiv(B, bt)), num_tc)
        bt = max(8, _round_up(pl.cdiv(B, steps), 8))
    grid = (pl.cdiv(B, bt),)   # final block may be partial: OOB reads are harmless
                               # (row-independent compute), OOB writes are masked.

    full = lambda shape: pl.BlockSpec(shape, lambda i: (0, 0))
    in_specs = [
        pl.BlockSpec((bt, F), lambda i: (i, 0)),   # tab (narrow dtype OK; cast in-kernel)
        full((F, h1)),                             # w0 (bf16)
        full((h1, h2)),                            # w1 (BN1 folded, bf16)
        full((h2, out_dim)),                       # wc (BN2 folded, bf16)
        full((bias_rows, bias_cols)),              # packed biases (f32)
    ]
    out_spec = pl.BlockSpec((bt, out_dim), lambda i: (i, 0))

    return pl.pallas_call(
        kneenet_clinical_kernel,
        out_shape=jax.ShapeDtypeStruct((B, out_dim), jnp.float32),
        grid=grid,
        in_specs=in_specs,
        out_specs=out_spec,
        compiler_params=pltpu.CompilerParams(dimension_semantics=("parallel",)),
    )(tab, fused["w0"], fused["w1"], fused["wc"], fused["bias"])


# -----------------------------------------------------------------------------
# Pure-JAX f32 reference on the UN-fused params (validates BN folding + kernel).
# -----------------------------------------------------------------------------
def _bn_eval(x, gamma, beta, rmean, rvar):
    inv = jax.lax.rsqrt(rvar + BN_EPS)
    return (x - rmean) * inv * gamma + beta


def kneenet_clinical_reference(tab, p):
    hp = jax.lax.Precision.HIGHEST
    x = tab.astype(jnp.float32)
    h = jnp.maximum(jnp.dot(x, p["w0"], precision=hp) + p["b0"], 0.0)
    h = _bn_eval(h, p["g1"], p["be1"], p["rm1"], p["rv1"])
    h = jnp.maximum(jnp.dot(h, p["w1"], precision=hp) + p["b1"], 0.0)
    h = _bn_eval(h, p["g2"], p["be2"], p["rm2"], p["rv2"])
    return jnp.dot(h, p["wc"], precision=hp) + p["bc"]


if __name__ == "__main__":
    # Small shapes consistent with the module's clinical forward:
    #   tab_input_size=32, tab_layers=[64, 32], output_size=8
    B, TAB_IN = 64, 32
    TAB_LAYERS = [64, 32]
    OUT = 8

    key = jax.random.PRNGKey(0)
    k_x, k_p = jax.random.split(key)
    # Tabular input kept in a narrow dtype in HBM; the upcast/feed to the MXU is in-kernel.
    tab = jax.random.normal(k_x, (B, TAB_IN), jnp.float32).astype(jnp.bfloat16)

    params = init_kneenet_clinical_params(k_p, TAB_IN, TAB_LAYERS, OUT)
    fused = fold_bn_params(params)   # fold once, outside jit

    # Tolerances are relaxed vs the pure-f32 path because the kernel runs the matmuls
    # on the bf16 MXU (f32 accumulation), per the performance review.
    RTOL = ATOL = 3e-2

    # Main run (B is a multiple of the chosen tile -> single full block on v5e/v6e).
    y = jax.block_until_ready(kneenet_clinical_forward(tab, fused))
    y_ref = kneenet_clinical_reference(tab, params)
    np.testing.assert_allclose(np.asarray(y), np.asarray(y_ref), rtol=RTOL, atol=ATOL)

    # Ragged-batch run (exercises the partial-final-block path: no pad, no slice).
    tab_odd = tab[:10]
    y_odd = jax.block_until_ready(kneenet_clinical_forward(tab_odd, fused))
    y_odd_ref = kneenet_clinical_reference(tab_odd, params)
    np.testing.assert_allclose(np.asarray(y_odd), np.asarray(y_odd_ref), rtol=RTOL, atol=ATOL)

    print("KERNEL_OK")
</pallas_src>

<mosaic_0001>
module attributes {stable_mosaic.version = 11 : i64} {
  func.func @kneenet_clinical_kernel(%arg0: i32, %arg1: memref<64x32xbf16, #tpu.memory_space<vmem>>, %arg2: memref<32x64xbf16, #tpu.memory_space<vmem>>, %arg3: memref<64x32xbf16, #tpu.memory_space<vmem>>, %arg4: memref<32x8xbf16, #tpu.memory_space<vmem>>, %arg5: memref<3x64xf32, #tpu.memory_space<vmem>>, %arg6: memref<64x8xf32, #tpu.memory_space<vmem>>) attributes {dimension_semantics = [#tpu.dimension_semantics<parallel>], iteration_bounds = array<i64: 1>, scalar_prefetch = 0 : i64, scratch_operands = 0 : i64, tpu.core_type = #tpu.core_type<tc>, window_params = [{transform_indices = @transform_0, window_bounds = array<i64: 64, 32>}, {pipeline_mode = #tpu.pipeline_mode<synchronous>, transform_indices = @transform_1, window_bounds = array<i64: 32, 64>}, {pipeline_mode = #tpu.pipeline_mode<synchronous>, transform_indices = @transform_2, window_bounds = array<i64: 64, 32>}, {pipeline_mode = #tpu.pipeline_mode<synchronous>, transform_indices = @transform_3, window_bounds = array<i64: 32, 8>}, {pipeline_mode = #tpu.pipeline_mode<synchronous>, transform_indices = @transform_4, window_bounds = array<i64: 3, 64>}, {transform_indices = @transform_5, window_bounds = array<i64: 64, 8>}]} {
    %c0 = arith.constant 0 : index
    %c0_0 = arith.constant 0 : index
    %0 = vector.load %arg1[%c0, %c0_0] : memref<64x32xbf16, #tpu.memory_space<vmem>>, vector<64x32xbf16>
    %c0_1 = arith.constant 0 : index
    %c0_2 = arith.constant 0 : index
    %1 = vector.load %arg5[%c0_1, %c0_2] : memref<3x64xf32, #tpu.memory_space<vmem>>, vector<1x64xf32>
    %c1 = arith.constant 1 : index
    %c0_3 = arith.constant 0 : index
    %2 = vector.load %arg5[%c1, %c0_3] : memref<3x64xf32, #tpu.memory_space<vmem>>, vector<1x32xf32>
    %c2 = arith.constant 2 : index
    %c0_4 = arith.constant 0 : index
    %3 = vector.load %arg5[%c2, %c0_4] : memref<3x64xf32, #tpu.memory_space<vmem>>, vector<1x8xf32>
    %c0_5 = arith.constant 0 : index
    %c0_6 = arith.constant 0 : index
    %4 = vector.load %arg2[%c0_5, %c0_6] : memref<32x64xbf16, #tpu.memory_space<vmem>>, vector<32x64xbf16>
    %cst = arith.constant dense<0.000000e+00> : vector<64x64xf32>
    %5 = tpu.matmul %0, %4, %cst {dimension_numbers = #tpu.dot_dimension_numbers<[1], [0], [0], [1], [0, 0, 1, 1], [], []>} : vector<64x32xbf16>, vector<32x64xbf16>, vector<64x64xf32> -> vector<64x64xf32>
    %6 = vector.broadcast %1 : vector<1x64xf32> to vector<64x64xf32>
    %7 = arith.addf %5, %6 : vector<64x64xf32>
    %cst_7 = arith.constant 0.000000e+00 : f32
    %8 = vector.broadcast %cst_7 : f32 to vector<64x64xf32>
    %9 = arith.maximumf %7, %8 : vector<64x64xf32>
    %10 = arith.truncf %9 : vector<64x64xf32> to vector<64x64xbf16>
    %c0_8 = arith.constant 0 : index
    %c0_9 = arith.constant 0 : index
    %11 = vector.load %arg3[%c0_8, %c0_9] : memref<64x32xbf16, #tpu.memory_space<vmem>>, vector<64x32xbf16>
    %cst_10 = arith.constant dense<0.000000e+00> : vector<64x32xf32>
    %12 = tpu.matmul %10, %11, %cst_10 {dimension_numbers = #tpu.dot_dimension_numbers<[1], [0], [0], [1], [0, 0, 1, 1], [], []>} : vector<64x64xbf16>, vector<64x32xbf16>, vector<64x32xf32> -> vector<64x32xf32>
    %13 = vector.broadcast %2 : vector<1x32xf32> to vector<64x32xf32>
    %14 = arith.addf %12, %13 : vector<64x32xf32>
    %cst_11 = arith.constant 0.000000e+00 : f32
    %15 = vector.broadcast %cst_11 : f32 to vector<64x32xf32>
    %16 = arith.maximumf %14, %15 : vector<64x32xf32>
    %17 = arith.truncf %16 : vector<64x32xf32> to vector<64x32xbf16>
    %c0_12 = arith.constant 0 : index
    %c0_13 = arith.constant 0 : index
    %18 = vector.load %arg4[%c0_12, %c0_13] : memref<32x8xbf16, #tpu.memory_space<vmem>>, vector<32x8xbf16>
    %cst_14 = arith.constant dense<0.000000e+00> : vector<64x8xf32>
    %19 = tpu.matmul %17, %18, %cst_14 {dimension_numbers = #tpu.dot_dimension_numbers<[1], [0], [0], [1], [0, 0, 1, 1], [], []>} : vector<64x32xbf16>, vector<32x8xbf16>, vector<64x8xf32> -> vector<64x8xf32>
    %20 = vector.broadcast %3 : vector<1x8xf32> to vector<64x8xf32>
    %21 = arith.addf %19, %20 : vector<64x8xf32>
    %c0_15 = arith.constant 0 : index
    %c0_16 = arith.constant 0 : index
    %22 = vector.load %arg6[%c0_15, %c0_16] : memref<64x8xf32, #tpu.memory_space<vmem>>, vector<64x8xf32>
    tpu.vector_store %arg6[%c0_15, %c0_16], %21 {strides = array<i32>} : memref<64x8xf32, #tpu.memory_space<vmem>>, vector<64x8xf32>,
    return
  }
  func.func @transform_0(%arg0: i32) -> (i32, i32) {
    %c0_i32 = arith.constant 0 : i32
    %c0_i32_0 = arith.constant 0 : i32
    return %arg0, %c0_i32 : i32, i32
  }
  func.func @transform_1(%arg0: i32) -> (i32, i32) {
    %c0_i32 = arith.constant 0 : i32
    %c0_i32_0 = arith.constant 0 : i32
    %c0_i32_1 = arith.constant 0 : i32
    return %c0_i32, %c0_i32_0 : i32, i32
  }
  func.func @transform_2(%arg0: i32) -> (i32, i32) {
    %c0_i32 = arith.constant 0 : i32
    %c0_i32_0 = arith.constant 0 : i32
    %c0_i32_1 = arith.constant 0 : i32
    return %c0_i32, %c0_i32_0 : i32, i32
  }
  func.func @transform_3(%arg0: i32) -> (i32, i32) {
    %c0_i32 = arith.constant 0 : i32
    %c0_i32_0 = arith.constant 0 : i32
    %c0_i32_1 = arith.constant 0 : i32
    return %c0_i32, %c0_i32_0 : i32, i32
  }
  func.func @transform_4(%arg0: i32) -> (i32, i32) {
    %c0_i32 = arith.constant 0 : i32
    %c0_i32_0 = arith.constant 0 : i32
    %c0_i32_1 = arith.constant 0 : i32
    return %c0_i32, %c0_i32_0 : i32, i32
  }
  func.func @transform_5(%arg0: i32) -> (i32, i32) {
    %c0_i32 = arith.constant 0 : i32
    %c0_i32_0 = arith.constant 0 : i32
    return %arg0, %c0_i32 : i32, i32
  }
}

</mosaic_0001>

<llo_original>
// kernel: kneenet_clinical_forward.1
$region0: #{kneenet_clinical_forward.1}
  #allocation0 [shape = 'u32[]', space=smem, size = 0x4, offset = 0x4, fixed_abs, tag = 'smem constant byte address 0x4 - core index']
  #allocation1 [shape = 'u32[72,128]{1,0:T(1,128)}', space=vmem, size = 0x9000, scoped, tag = 'internal scratch']
  %s0 = inlined_call_operand.vmem [shape: bf16[64,32], index: 0, kind: input, shape index: {}]
  %s1 = inlined_call_operand.vmem [shape: bf16[32,64], index: 1, kind: input, shape index: {}]
  %s2 = inlined_call_operand.vmem [shape: bf16[64,32], index: 2, kind: input, shape index: {}]
  %s3 = inlined_call_operand.vmem [shape: bf16[32,8], index: 3, kind: input, shape index: {}]
  %s4 = inlined_call_operand.vmem [shape: f32[3,64], index: 4, kind: input, shape index: {}]
  %s5 = inlined_call_operand.vmem [shape: f32[64,8], index: 5, kind: output, shape index: {}]
  %s6 = sld [smem:[#allocation0]]
  $region30: #{kneenet_clinical_forward.1} parent=0
    _
  %s8 = ssub.s32 1, %s6
  %s9 = scalar_select 0, %s8, %s6
  // Predicated region
  $region2: #{kneenet_clinical_forward.1} parent=0 // pred_check
    _
  $region3: #{kneenet_clinical_forward.1} parent=0 // pred_check_branch
    %11 = sbr.rel (0) target = $region5
  $region4: #{kneenet_clinical_forward.1} parent=0 // pred_region
    _
  $region5: #{kneenet_clinical_forward.1} parent=0 // pred_fallthru
    _
  // Predicated region
  $region6: #{kneenet_clinical_forward.1} parent=0 // pred_check
    _
  $region7: #{kneenet_clinical_forward.1} parent=0 // pred_check_branch
    %13 = sbr.rel (0) target = $region9
  $region8: #{kneenet_clinical_forward.1} parent=0 // pred_region
    _
  $region9: #{kneenet_clinical_forward.1} parent=0 // pred_fallthru
    _
  // Predicated region
  $region10: #{kneenet_clinical_forward.1} parent=0 // pred_check
    _
  $region11: #{kneenet_clinical_forward.1} parent=0 // pred_check_branch
    %15 = sbr.rel (0) target = $region13
  $region12: #{kneenet_clinical_forward.1} parent=0 // pred_region
    _
  $region13: #{kneenet_clinical_forward.1} parent=0 // pred_fallthru
    _
  // Predicated region
  $region14: #{kneenet_clinical_forward.1} parent=0 // pred_check
    _
  $region15: #{kneenet_clinical_forward.1} parent=0 // pred_check_branch
    %17 = sbr.rel (0) target = $region17
  $region16: #{kneenet_clinical_forward.1} parent=0 // pred_region
    _
  $region17: #{kneenet_clinical_forward.1} parent=0 // pred_fallthru
    _
  // Predicated region
  $region18: #{kneenet_clinical_forward.1} parent=0 // pred_check
    _
  $region19: #{kneenet_clinical_forward.1} parent=0 // pred_check_branch
    %19 = sbr.rel (0) target = $region21
  $region20: #{kneenet_clinical_forward.1} parent=0 // pred_region
    _
  $region21: #{kneenet_clinical_forward.1} parent=0 // pred_fallthru
    _
  %v21 = vld [vmem:[%s0] sm:$0xf]
  %v22 = vld [vmem:[%s0 + $0x4] sm:$0xf]
  %v23 = vld [vmem:[%s0 + $0x8] sm:$0xf]
  %v24 = vld [vmem:[%s0 + $0xc] sm:$0xf]
  %v25 = vld [vmem:[%s0 + $0x10] sm:$0xf]
  %v26 = vld [vmem:[%s0 + $0x14] sm:$0xf]
  %v27 = vld [vmem:[%s0 + $0x18] sm:$0xf]
  %v28 = vld [vmem:[%s0 + $0x1c] sm:$0xf]
  %v29 = vld [vmem:[%s4] sm:$0x1]
  %v30 = vld [vmem:[%s4 + $0x1] sm:$0x1]
  %v31 = vld [vmem:[%s4 + $0x2] sm:$0x1]
  %v32 = vld [vmem:[%s1] sm:$0xf]
  %v33 = vld [vmem:[%s1 + $0x4] sm:$0xf]
  %v34 = vld [vmem:[%s1 + $0x8] sm:$0xf]
  %v35 = vld [vmem:[%s1 + $0xc] sm:$0xf]
  %v36 = vperm.slane %v29, 0
  %v45 = vunpack.c.l.b16 %v21
  %v46 = vunpack.c.l.b16 %v22
  %v47 = vunpack.c.l.b16 %v23
  %v48 = vunpack.c.l.b16 %v24
  %v49 = vunpack.c.l.b16 %v25
  %v50 = vunpack.c.l.b16 %v26
  %v51 = vunpack.c.l.b16 %v27
  %v52 = vunpack.c.l.b16 %v28
  %v53 = vpack.c.b16 %v46, %v45
  %v54 = vpack.c.b16 %v48, %v47
  %v55 = vpack.c.b16 %v50, %v49
  %v56 = vpack.c.b16 %v52, %v51
  %v61 = vunpack.c.l.b16 %v32
  %v62 = vunpack.c.l.b16 %v33
  %v63 = vunpack.c.l.b16 %v34
  %v64 = vunpack.c.l.b16 %v35
  %v65 = vpack.c.b16 %v62, %v61
  %v66 = vpack.c.b16 %v64, %v63
  %vm69 = vcmask 261120
  %v71 = vsel %vm69, %v53, 0
  %v74 = vsel %vm69, %v54, 0
  %v77 = vsel %vm69, %v55, 0
  %v80 = vsel %vm69, %v56, 0
  %82 = vmatpush.bf16.msra.mxu0 0
  %83 = vmatpush.bf16.msra.mxu0 0
  %84 = vmatpush.bf16.msra.mxu0 0
  %85 = vmatpush.bf16.msra.mxu0 0
  %86 = vmatpush.bf16.msra.mxu0 0
  %87 = vmatpush.bf16.msra.mxu0 0
  %88 = vmatpush.bf16.msra.mxu0 %v66
  %89 = vmatpush.bf16.msra.mxu0 %v65
  %90 = vmatmul.bf16.gmra.mxu0 %v71
  %v91 = vpop.f32.mrf.mxu0
  %v92 = vadd.f32 %v36, %v91
  %v93 = vpop.f32.mrf.mxu0
  %v94 = vadd.f32 %v36, %v93
  %95 = vmatmul.bf16.gmra.mxu0 %v74
  %v96 = vpop.f32.mrf.mxu0
  %v97 = vadd.f32 %v36, %v96
  %v98 = vpop.f32.mrf.mxu0
  %v99 = vadd.f32 %v36, %v98
  %100 = vmatmul.bf16.gmra.mxu0 %v77
  %v101 = vpop.f32.mrf.mxu0
  %v102 = vadd.f32 %v36, %v101
  %v103 = vpop.f32.mrf.mxu0
  %v104 = vadd.f32 %v36, %v103
  %105 = vmatmul.bf16.gmra.mxu0 %v80
  %v106 = vpop.f32.mrf.mxu0
  %v107 = vadd.f32 %v36, %v106
  %v108 = vpop.f32.mrf.mxu0
  %v109 = vadd.f32 %v36, %v108
  %110 = vdwg.mxu0
  %v111 = vmax.f32 %v92, 0.0
  %v112 = vmax.f32 %v94, 0.0
  %v113 = vmax.f32 %v97, 0.0
  %v114 = vmax.f32 %v99, 0.0
  %v115 = vmax.f32 %v102, 0.0
  %v116 = vmax.f32 %v104, 0.0
  %v117 = vmax.f32 %v107, 0.0
  %v118 = vmax.f32 %v109, 0.0
  %v119 = vpack.c.bf16 %v112, %v111
  %v120 = vpack.c.bf16 %v114, %v113
  %v121 = vpack.c.bf16 %v116, %v115
  %v122 = vpack.c.bf16 %v118, %v117
  %v123 = vld [vmem:[%s2] sm:$0xf]
  %v124 = vld [vmem:[%s2 + $0x4] sm:$0xf]
  %v125 = vld [vmem:[%s2 + $0x8] sm:$0xf]
  %v126 = vld [vmem:[%s2 + $0xc] sm:$0xf]
  %v127 = vld [vmem:[%s2 + $0x10] sm:$0xf]
  %v128 = vld [vmem:[%s2 + $0x14] sm:$0xf]
  %v129 = vld [vmem:[%s2 + $0x18] sm:$0xf]
  %v130 = vld [vmem:[%s2 + $0x1c] sm:$0xf]
  %v131 = vperm.slane %v30, 0
  %v140 = vunpack.c.l.b16 %v123
  %v141 = vunpack.c.l.b16 %v124
  %v142 = vunpack.c.l.b16 %v125
  %v143 = vunpack.c.l.b16 %v126
  %v144 = vunpack.c.l.b16 %v127
  %v145 = vunpack.c.l.b16 %v128
  %v146 = vunpack.c.l.b16 %v129
  %v147 = vunpack.c.l.b16 %v130
  %v148 = vpack.c.b16 %v141, %v140
  %v149 = vpack.c.b16 %v143, %v142
  %v150 = vpack.c.b16 %v145, %v144
  %v151 = vpack.c.b16 %v147, %v146
  %vm156 = vcmask 523264
  %v158 = vsel %vm156, %v119, 0
  %v161 = vsel %vm156, %v120, 0
  %v164 = vsel %vm156, %v121, 0
  %v167 = vsel %vm156, %v122, 0
  %169 = vmatpush.bf16.msra.mxu0 0
  %170 = vmatpush.bf16.msra.mxu0 0
  %171 = vmatpush.bf16.msra.mxu0 0
  %172 = vmatpush.bf16.msra.mxu0 0
  %173 = vmatpush.bf16.msra.mxu0 %v151
  %174 = vmatpush.bf16.msra.mxu0 %v150
  %175 = vmatpush.bf16.msra.mxu0 %v149
  %176 = vmatpush.bf16.msra.mxu0 %v148
  %177 = vmatmul.bf16.gmra.mxu0 %v158
  %v178 = vpop.f32.mrf.mxu0
  %v179 = vadd.f32 %v131, %v178
  %v180 = vpop.f32.mrf.mxu0
  %v181 = vadd.f32 %v131, %v180
  %182 = vmatmul.bf16.gmra.mxu0 %v161
  %v183 = vpop.f32.mrf.mxu0
  %v184 = vadd.f32 %v131, %v183
  %v185 = vpop.f32.mrf.mxu0
  %v186 = vadd.f32 %v131, %v185
  %187 = vmatmul.bf16.gmra.mxu0 %v164
  %v188 = vpop.f32.mrf.mxu0
  %v189 = vadd.f32 %v131, %v188
  %v190 = vpop.f32.mrf.mxu0
  %v191 = vadd.f32 %v131, %v190
  %192 = vmatmul.bf16.gmra.mxu0 %v167
  %v193 = vpop.f32.mrf.mxu0
  %v194 = vadd.f32 %v131, %v193
  %v195 = vpop.f32.mrf.mxu0
  %v196 = vadd.f32 %v131, %v195
  %197 = vdwg.mxu0
  %v198 = vmax.f32 %v179, 0.0
  %v199 = vmax.f32 %v181, 0.0
  %v200 = vmax.f32 %v184, 0.0
  %v201 = vmax.f32 %v186, 0.0
  %v202 = vmax.f32 %v189, 0.0
  %v203 = vmax.f32 %v191, 0.0
  %v204 = vmax.f32 %v194, 0.0
  %v205 = vmax.f32 %v196, 0.0
  %v206 = vpack.c.bf16 %v199, %v198
  %v207 = vpack.c.bf16 %v201, %v200
  %v208 = vpack.c.bf16 %v203, %v202
  %v209 = vpack.c.bf16 %v205, %v204
  %v210 = vld [vmem:[%s3] sm:$0xf]
  %v211 = vld [vmem:[%s3 + $0x4] sm:$0xf]
  %v212 = vld [vmem:[%s3 + $0x8] sm:$0xf]
  %v213 = vld [vmem:[%s3 + $0xc] sm:$0xf]
  %v214 = vperm.slane %v31, 0
  %v219 = vunpack.c.l.b16 %v210
  %v220 = vunpack.c.l.b16 %v211
  %v221 = vunpack.c.l.b16 %v212
  %v222 = vunpack.c.l.b16 %v213
  %v223 = vpack.c.b16 %v220, %v219
  %v224 = vpack.c.b16 %v222, %v221
  %v228 = vsel %vm69, %v206, 0
  %v231 = vsel %vm69, %v207, 0
  %v234 = vsel %vm69, %v208, 0
  %v237 = vsel %vm69, %v209, 0
  %239 = vmatpush.bf16.msra.mxu0 0
  %240 = vmatpush.bf16.msra.mxu0 0
  %241 = vmatpush.bf16.msra.mxu0 0
  %242 = vmatpush.bf16.msra.mxu0 0
  %243 = vmatpush.bf16.msra.mxu0 0
  %244 = vmatpush.bf16.msra.mxu0 0
  %245 = vmatpush.bf16.msra.mxu0 %v224
  %246 = vmatpush.bf16.msra.mxu0 %v223
  %247 = vmatmul.bf16.gmra.mxu0 %v228
  %v248 = vpop.f32.mrf.mxu0
  %v249 = vadd.f32 %v214, %v248
  %v250 = vpop.f32.mrf.mxu0
  %v251 = vadd.f32 %v214, %v250
  %252 = vmatmul.bf16.gmra.mxu0 %v231
  %v253 = vpop.f32.mrf.mxu0
  %v254 = vadd.f32 %v214, %v253
  %v255 = vpop.f32.mrf.mxu0
  %v256 = vadd.f32 %v214, %v255
  %257 = vmatmul.bf16.gmra.mxu0 %v234
  %v258 = vpop.f32.mrf.mxu0
  %v259 = vadd.f32 %v214, %v258
  %v260 = vpop.f32.mrf.mxu0
  %v261 = vadd.f32 %v214, %v260
  %262 = vmatmul.bf16.gmra.mxu0 %v237
  %v263 = vpop.f32.mrf.mxu0
  %v264 = vadd.f32 %v214, %v263
  %v265 = vpop.f32.mrf.mxu0
  %v266 = vadd.f32 %v214, %v265
  %267 = vdwg.mxu0
  %vm268 = vcmask 64512
  %269 = vst.msk [vmem:[%s5] sm:$0xff] %vm268, %v249
  %270 = vst.msk [vmem:[%s5 + $0x8] sm:$0xff] %vm268, %v251
  %271 = vst.msk [vmem:[%s5 + $0x10] sm:$0xff] %vm268, %v254
  %272 = vst.msk [vmem:[%s5 + $0x18] sm:$0xff] %vm268, %v256
  %273 = vst.msk [vmem:[%s5 + $0x20] sm:$0xff] %vm268, %v259
  %274 = vst.msk [vmem:[%s5 + $0x28] sm:$0xff] %vm268, %v261
  %275 = vst.msk [vmem:[%s5 + $0x30] sm:$0xff] %vm268, %v264
  %276 = vst.msk [vmem:[%s5 + $0x38] sm:$0xff] %vm268, %v266
  // Predicated region
  $region22: #{kneenet_clinical_forward.1} parent=0 // pred_check
    _
  $region23: #{kneenet_clinical_forward.1} parent=0 // pred_check_branch
    %278 = sbr.rel (0) target = $region25
  $region24: #{kneenet_clinical_forward.1} parent=0 // pred_region
    _
  $region25: #{kneenet_clinical_forward.1} parent=0 // pred_fallthru
    _
  // Predicated region
  $region26: #{kneenet_clinical_forward.1} parent=0 // pred_check
    _
  $region27: #{kneenet_clinical_forward.1} parent=0 // pred_check_branch
    %280 = sbr.rel (0) target = $region29
  $region28: #{kneenet_clinical_forward.1} parent=0 // pred_region
    _
  $region29: #{kneenet_clinical_forward.1} parent=0 // pred_fallthru
    _

</llo_original>
